<compile_context>
chip_gen: v7x
topology: tpu7x:2x2x1
jax: 0.10.0
libtpu: 0.0.40
codegen_flags: <defaults>
</compile_context>

<pallas_src>
import jax
import jax.numpy as jnp
from jax.experimental import pallas as pl
from jax.experimental.pallas import tpu as pltpu

_LANE = 128


def _round_up(x, m):
    return (x + m - 1) // m * m


def _conv1x1_bn_silu_kernel(x_ref, w_ref, scale_ref, shift_ref, o_ref):
    # x_ref:     (1, C1, THW)  activation tile (original dtype, not bulk-upcast)
    # w_ref:     (C2, C1)      1x1 conv weight
    # scale_ref: (C2, 1)       folded BN scale  = gamma / sqrt(var + eps)   (f32)
    # shift_ref: (C2, 1)       folded BN shift  = beta - mean * scale       (f32)
    # o_ref:     (1, C2, THW)
    x = x_ref[0]                                                    # (C1, THW)
    acc = jnp.dot(w_ref[...], x,
                  preferred_element_type=jnp.float32)               # (C2, THW) f32 on MXU
    y = acc * scale_ref[...] + shift_ref[...]                       # BN (eval mode)
    y = y * (1.0 / (1.0 + jnp.exp(-y)))                             # SiLU (exp on EUP)
    o_ref[0] = y.astype(o_ref.dtype)


def conv_forward(x_nchw, weight, bn_gamma, bn_beta, bn_mean, bn_var, eps=1e-5):
    """Forward of YOLOv5 Conv with default k=1, s=1, g=1: SiLU(BN(Conv2d(x))).

    x_nchw: (B, C1, H, W); weight: (C2, C1, 1, 1); bn_*: (C2,)  ->  (B, C2, H, W)
    BatchNorm uses running statistics (inference-mode forward).
    """
    # TODO(synk): only the default k=1 / s=1 / groups=1 pointwise conv is
    # implemented; general k/stride/groups would need an im2col/halo kernel.
    B, C1, H, W = x_nchw.shape
    C2 = weight.shape[0]
    assert weight.shape[2] == 1 and weight.shape[3] == 1, "only k=1 supported"
    HW = H * W
    dtype = x_nchw.dtype
    itemsize = jnp.dtype(dtype).itemsize

    # Fold BatchNorm (conv has no bias) into per-channel scale/shift in f32.
    scale = (bn_gamma.astype(jnp.float32)
             / jnp.sqrt(bn_var.astype(jnp.float32) + eps))           # (C2,)
    shift = bn_beta.astype(jnp.float32) - bn_mean.astype(jnp.float32) * scale
    scale = scale.reshape(C2, 1)
    shift = shift.reshape(C2, 1)

    # Free reshape: (B, C1, H, W) -> (B, C1, HW). No padding anywhere.
    x_flat = x_nchw.reshape(B, C1, HW)
    w_mat = weight.reshape(C2, C1).astype(dtype)

    # Spatial tile: lane-dense multiple of 128 (or full HW when HW < 128),
    # capped at 2048 lanes, and bounded so double-buffered input+output tiles
    # stay within an ~8 MiB budget (safe under the default scoped-VMEM limit on
    # v5e/v6e and the 64 MiB physical VMEM on v7x).
    if HW <= _LANE:
        thw = HW                                   # full-extent block is legal
    else:
        budget_bytes = 8 * 1024 * 1024
        per_lane_bytes = 2 * (C1 + C2) * itemsize  # double-buffered x + y tiles
        max_lanes = max(_LANE,
                        (budget_bytes // max(1, per_lane_bytes)) // _LANE * _LANE)
        thw = min(2048, max_lanes, _round_up(HW, _LANE))

    grid = (B, pl.cdiv(HW, thw))

    cost = pl.CostEstimate(
        flops=2 * B * HW * C1 * C2,
        transcendentals=B * HW * C2,
        bytes_accessed=(B * C1 * HW * itemsize              # stream x
                        + C2 * C1 * itemsize + 2 * C2 * 4   # weight + BN params
                        + B * C2 * HW * itemsize),          # store y
    )

    out = pl.pallas_call(
        _conv1x1_bn_silu_kernel,
        out_shape=jax.ShapeDtypeStruct((B, C2, HW), dtype),
        grid_spec=pltpu.PrefetchScalarGridSpec(
            num_scalar_prefetch=0,
            grid=grid,
            in_specs=[
                pl.BlockSpec((1, C1, thw), lambda b, s: (b, 0, s)),
                pl.BlockSpec((C2, C1), lambda b, s: (0, 0)),
                pl.BlockSpec((C2, 1), lambda b, s: (0, 0)),
                pl.BlockSpec((C2, 1), lambda b, s: (0, 0)),
            ],
            out_specs=pl.BlockSpec((1, C2, thw), lambda b, s: (b, 0, s)),
        ),
        compiler_params=pltpu.CompilerParams(
            dimension_semantics=("parallel", "parallel")),
        cost_estimate=cost,
    )(x_flat, w_mat, scale, shift)

    return out.reshape(B, C2, H, W)


def _reference(x, weight, gamma, beta, mean, var, eps=1e-5):
    w = weight.reshape(weight.shape[0], -1)                         # (C2, C1)
    y = jnp.einsum('oc,bchw->bohw', w, x,
                   precision=jax.lax.Precision.HIGHEST)
    scale = gamma / jnp.sqrt(var + eps)
    shift = beta - mean * scale
    y = y * scale[None, :, None, None] + shift[None, :, None, None]
    return y * jax.nn.sigmoid(y)


if __name__ == "__main__":
    key = jax.random.PRNGKey(0)
    kx, kw, kg, kb, km, kv = jax.random.split(key, 6)

    B, C1, H, W = 2, 4, 16, 16
    C2 = 8

    x = jax.random.normal(kx, (B, C1, H, W), dtype=jnp.float32)
    weight = jax.random.normal(kw, (C2, C1, 1, 1), dtype=jnp.float32) * 0.1
    gamma = 1.0 + 0.1 * jax.random.normal(kg, (C2,), dtype=jnp.float32)
    beta = 0.1 * jax.random.normal(kb, (C2,), dtype=jnp.float32)
    mean = 0.1 * jax.random.normal(km, (C2,), dtype=jnp.float32)
    var = jax.random.uniform(kv, (C2,), dtype=jnp.float32, minval=0.5, maxval=1.5)

    out = jax.block_until_ready(conv_forward(x, weight, gamma, beta, mean, var))
    ref = _reference(x, weight, gamma, beta, mean, var)

    assert out.shape == (B, C2, H, W), out.shape
    err = jnp.max(jnp.abs(out - ref))
    assert jnp.allclose(out, ref, atol=2e-3, rtol=2e-3), f"max abs err {err}"
    print("KERNEL_OK")
</pallas_src>

<mosaic_0001>
module attributes {stable_mosaic.version = 11 : i64} {
  func.func @_conv1x1_bn_silu_kernel(%arg0: i32, %arg1: i32, %arg2: memref<1x4x256xf32, #tpu.memory_space<vmem>>, %arg3: memref<8x4xf32, #tpu.memory_space<vmem>>, %arg4: memref<8x1xf32, #tpu.memory_space<vmem>>, %arg5: memref<8x1xf32, #tpu.memory_space<vmem>>, %arg6: memref<1x8x256xf32, #tpu.memory_space<vmem>>) attributes {dimension_semantics = [#tpu.dimension_semantics<parallel>, #tpu.dimension_semantics<parallel>], iteration_bounds = array<i64: 2, 1>, scalar_prefetch = 0 : i64, scratch_operands = 0 : i64, tpu.core_type = #tpu.core_type<tc>, window_params = [{transform_indices = @transform_0, window_bounds = array<i64: 1, 4, 256>}, {pipeline_mode = #tpu.pipeline_mode<synchronous>, transform_indices = @transform_1, window_bounds = array<i64: 8, 4>}, {pipeline_mode = #tpu.pipeline_mode<synchronous>, transform_indices = @transform_2, window_bounds = array<i64: 8, 1>}, {pipeline_mode = #tpu.pipeline_mode<synchronous>, transform_indices = @transform_3, window_bounds = array<i64: 8, 1>}, {transform_indices = @transform_4, window_bounds = array<i64: 1, 8, 256>}]} {
    %c0 = arith.constant 0 : index
    %c0_0 = arith.constant 0 : index
    %c0_1 = arith.constant 0 : index
    %0 = vector.load %arg2[%c0, %c0_0, %c0_1] : memref<1x4x256xf32, #tpu.memory_space<vmem>>, vector<1x4x256xf32>
    %1 = vector.shape_cast %0 : vector<1x4x256xf32> to vector<4x256xf32>
    %c0_2 = arith.constant 0 : index
    %c0_3 = arith.constant 0 : index
    %2 = vector.load %arg3[%c0_2, %c0_3] : memref<8x4xf32, #tpu.memory_space<vmem>>, vector<8x4xf32>
    %cst = arith.constant dense<0.000000e+00> : vector<8x256xf32>
    %3 = tpu.matmul %2, %1, %cst {dimension_numbers = #tpu.dot_dimension_numbers<[1], [0], [0], [1], [0, 0, 1, 1], [], []>} : vector<8x4xf32>, vector<4x256xf32>, vector<8x256xf32> -> vector<8x256xf32>
    %c0_4 = arith.constant 0 : index
    %c0_5 = arith.constant 0 : index
    %4 = vector.load %arg4[%c0_4, %c0_5] : memref<8x1xf32, #tpu.memory_space<vmem>>, vector<8x1xf32>
    %5 = vector.broadcast %4 : vector<8x1xf32> to vector<8x256xf32>
    %6 = arith.mulf %3, %5 : vector<8x256xf32>
    %c0_6 = arith.constant 0 : index
    %c0_7 = arith.constant 0 : index
    %7 = vector.load %arg5[%c0_6, %c0_7] : memref<8x1xf32, #tpu.memory_space<vmem>>, vector<8x1xf32>
    %8 = vector.broadcast %7 : vector<8x1xf32> to vector<8x256xf32>
    %9 = arith.addf %6, %8 : vector<8x256xf32>
    %cst_8 = arith.constant 0.000000e+00 : f32
    %10 = vector.broadcast %cst_8 : f32 to vector<8x256xf32>
    %11 = arith.subf %10, %9 : vector<8x256xf32>
    %12 = math.exp %11 : vector<8x256xf32>
    %cst_9 = arith.constant 1.000000e+00 : f32
    %13 = vector.broadcast %cst_9 : f32 to vector<8x256xf32>
    %14 = arith.addf %13, %12 : vector<8x256xf32>
    %cst_10 = arith.constant 1.000000e+00 : f32
    %15 = vector.broadcast %cst_10 : f32 to vector<8x256xf32>
    %16 = arith.divf %15, %14 : vector<8x256xf32>
    %17 = arith.mulf %9, %16 : vector<8x256xf32>
    %c0_11 = arith.constant 0 : index
    %c0_12 = arith.constant 0 : index
    %c0_13 = arith.constant 0 : index
    %18 = vector.load %arg6[%c0_11, %c0_12, %c0_13] : memref<1x8x256xf32, #tpu.memory_space<vmem>>, vector<1x8x256xf32>
    %19 = vector.shape_cast %18 : vector<1x8x256xf32> to vector<8x256xf32>
    %20 = vector.shape_cast %17 : vector<8x256xf32> to vector<1x8x256xf32>
    tpu.vector_store %arg6[%c0_11, %c0_12, %c0_13], %20 {strides = array<i32>} : memref<1x8x256xf32, #tpu.memory_space<vmem>>, vector<1x8x256xf32>,
    return
  }
  func.func @transform_0(%arg0: i32, %arg1: i32) -> (i32, i32, i32) {
    %c0_i32 = arith.constant 0 : i32
    %c0_i32_0 = arith.constant 0 : i32
    return %arg0, %c0_i32, %arg1 : i32, i32, i32
  }
  func.func @transform_1(%arg0: i32, %arg1: i32) -> (i32, i32) {
    %c0_i32 = arith.constant 0 : i32
    %c0_i32_0 = arith.constant 0 : i32
    %c0_i32_1 = arith.constant 0 : i32
    return %c0_i32, %c0_i32_0 : i32, i32
  }
  func.func @transform_2(%arg0: i32, %arg1: i32) -> (i32, i32) {
    %c0_i32 = arith.constant 0 : i32
    %c0_i32_0 = arith.constant 0 : i32
    %c0_i32_1 = arith.constant 0 : i32
    return %c0_i32, %c0_i32_0 : i32, i32
  }
  func.func @transform_3(%arg0: i32, %arg1: i32) -> (i32, i32) {
    %c0_i32 = arith.constant 0 : i32
    %c0_i32_0 = arith.constant 0 : i32
    %c0_i32_1 = arith.constant 0 : i32
    return %c0_i32, %c0_i32_0 : i32, i32
  }
  func.func @transform_4(%arg0: i32, %arg1: i32) -> (i32, i32, i32) {
    %c0_i32 = arith.constant 0 : i32
    %c0_i32_0 = arith.constant 0 : i32
    return %arg0, %c0_i32, %arg1 : i32, i32, i32
  }
}

</mosaic_0001>

<llo_original>
// kernel: tpu_custom_call.1
$region0: #{tpu_custom_call.1}
  #allocation0 [shape = 'u32[]', space=smem, size = 0x4, offset = 0x4, fixed_abs, tag = 'smem constant byte address 0x4 - core index']
  #allocation1 [shape = 'u32[144,128]{1,0:T(1,128)}', space=vmem, size = 0x12000, scoped, tag = 'internal scratch']
  %s0 = inlined_call_operand.vmem [shape: f32[2,4,256], index: 0, kind: input, shape index: {}]
  %s1 = inlined_call_operand.vmem [shape: f32[8,4], index: 1, kind: input, shape index: {}]
  %s2 = inlined_call_operand.vmem [shape: f32[8,1], index: 2, kind: input, shape index: {}]
  %s3 = inlined_call_operand.vmem [shape: f32[8,1], index: 3, kind: input, shape index: {}]
  %s4 = inlined_call_operand.hbm [shape: f32[2,8,256], index: 4, kind: output, shape index: {}]
  %s5 = sld [smem:[#allocation0]]
  $region49: #{tpu_custom_call.1} parent=0
    _
  %s7 = ssub.s32 1, %s5
  %s8 = scalar_select 0, %s7, %s5
  $region1: #{tpu_custom_call.1} parent=0
    #allocation2 [shape = 'u8[16384]{0}', space=vmem, size = 0x4000, scoped, tag = 'output window, operand 0']
    #allocation3 [shape = 's32[2]{0}', space=sflag, size = 0x8, scoped, tag = 'scoped memory for tpu_custom_call.1']
    %9 = vsyncpa [#allocation3], 0
    %s10 = scalar_lea.sflag [#allocation3], 1
    %11 = vsyncpa %s10, 0
    loop: start=0, step=1, limit=4
    $region2: #{tpu_custom_call.1} parent=1 // loop_pre_header
      _
    $region3: #{tpu_custom_call.1} parent=1 // loop_header
      %s13 = sphi 0, %s17
      %p14 = scmp.ge.s32.totalorder %s13, 4
      %s20 = sphi 0, %s32
      %s21 = sphi 0, %s28
      %s22 = sphi 0, %s20
      %s23 = sphi 0, %s21
      %s24 = sphi 0, %s22
      %s25 = sphi 0, %s23
      %s37 = sphi 0, %s39
      %s40 = sphi 0, %s37
      %s41 = sphi 0, %s40
      %s57 = sphi 0, %s41
      %s61 = sphi 0, %s61
      %s63 = sphi 0, %s61
      %s64 = sphi 0, %s63
      %s78 = sphi 0, %s64
      %s82 = sphi 0, %s82
      %s84 = sphi 0, %s82
      %s85 = sphi 0, %s84
      %s99 = sphi 0, %s85
      %s103 = sphi 0, %s103
      %s105 = sphi 0, %s103
      %s106 = sphi 0, %s105
      %s120 = sphi 0, %s106
      %s128 = sphi 0, %s130
      %s131 = sphi 0, %s128
      %s132 = sphi 0, %s131
      %s148 = sphi 0, %s132
    $region4: #{tpu_custom_call.1} parent=1 // loop_header_branch
      %16 = sbr.rel (%p14) target = $region8
    $region5: #{tpu_custom_call.1} parent=1 // loop_body
      %s18 = ssub.s32 %s13, 1
      %s19 = ssub.s32 %s13, 2
      %s26 = sadd.s32 1, %s21
      %p27 = scmp.ge.s32.totalorder %s26, 1
      %s28 = scalar_select %p27, 0, %s26
      %s29 = sadd.s32 1, %s20
      %s30 = scalar_select %p27, %s29, %s20
      %p31 = scmp.ge.s32.totalorder %s30, 2
      %s32 = scalar_select %p31, 0, %s30
      %s33 = ssub.s32 %s20, %s32
      %s34 = ssub.s32 %s21, %s28
      %s35 = sor.u32 %s33, %s34
      %p36 = scmp.eq.s32.totalorder %s35, 0
      %s38 = sadd.s32 %s37, 1
      %s39 = scalar_select %p36, %s37, %s38
      %p42 = pneg %p36
      %p43 = scmp.eq.s32.totalorder %s13, 1
      %p44 = por %p42, %p43
      %p45 = scmp.ne.s32.totalorder %s37, %s40
      %p46 = scmp.eq.s32.totalorder %s13, 0
      %p47 = por %p45, %p46
      %p48 = scmp.ne.s32.totalorder %s37, %s40
      %p49 = scmp.eq.s32.totalorder %s18, 1
      %p50 = por %p48, %p49
      %p51 = scmp.ne.s32.totalorder %s40, %s41
      %p52 = scmp.eq.s32.totalorder %s18, 0
      %p53 = por %p51, %p52
      %p54 = scmp.ne.s32.totalorder %s40, %s41
      %p55 = scmp.eq.s32.totalorder %s19, 1
      %p56 = por %p54, %p55
      %p58 = scmp.ne.s32.totalorder %s41, %s57
      %p59 = scmp.eq.s32.totalorder %s19, 0
      %p60 = por %p58, %p59
      %s62 = sadd.s32 %s61, 1
      %p65 = scmp.eq.s32.totalorder %s13, 1
      %p66 = scmp.ne.s32.totalorder %s61, %s63
      %p67 = scmp.eq.s32.totalorder %s13, 0
      %p68 = por %p66, %p67
      %p69 = scmp.ne.s32.totalorder %s61, %s63
      %p70 = scmp.eq.s32.totalorder %s18, 1
      %p71 = por %p69, %p70
      %p72 = scmp.ne.s32.totalorder %s63, %s64
      %p73 = scmp.eq.s32.totalorder %s18, 0
      %p74 = por %p72, %p73
      %p75 = scmp.ne.s32.totalorder %s63, %s64
      %p76 = scmp.eq.s32.totalorder %s19, 1
      %p77 = por %p75, %p76
      %p79 = scmp.ne.s32.totalorder %s64, %s78
      %p80 = scmp.eq.s32.totalorder %s19, 0
      %p81 = por %p79, %p80
      %s83 = sadd.s32 %s82, 1
      %p86 = scmp.eq.s32.totalorder %s13, 1
      %p87 = scmp.ne.s32.totalorder %s82, %s84
      %p88 = scmp.eq.s32.totalorder %s13, 0
      %p89 = por %p87, %p88
      %p90 = scmp.ne.s32.totalorder %s82, %s84
      %p91 = scmp.eq.s32.totalorder %s18, 1
      %p92 = por %p90, %p91
      %p93 = scmp.ne.s32.totalorder %s84, %s85
      %p94 = scmp.eq.s32.totalorder %s18, 0
      %p95 = por %p93, %p94
      %p96 = scmp.ne.s32.totalorder %s84, %s85
      %p97 = scmp.eq.s32.totalorder %s19, 1
      %p98 = por %p96, %p97
      %p100 = scmp.ne.s32.totalorder %s85, %s99
      %p101 = scmp.eq.s32.totalorder %s19, 0
      %p102 = por %p100, %p101
      %s104 = sadd.s32 %s103, 1
      %p107 = scmp.eq.s32.totalorder %s13, 1
      %p108 = scmp.ne.s32.totalorder %s103, %s105
      %p109 = scmp.eq.s32.totalorder %s13, 0
      %p110 = por %p108, %p109
      %p111 = scmp.ne.s32.totalorder %s103, %s105
      %p112 = scmp.eq.s32.totalorder %s18, 1
      %p113 = por %p111, %p112
      %p114 = scmp.ne.s32.totalorder %s105, %s106
      %p115 = scmp.eq.s32.totalorder %s18, 0
      %p116 = por %p114, %p115
      %p117 = scmp.ne.s32.totalorder %s105, %s106
      %p118 = scmp.eq.s32.totalorder %s19, 1
      %p119 = por %p117, %p118
      %p121 = scmp.ne.s32.totalorder %s106, %s120
      %p122 = scmp.eq.s32.totalorder %s19, 0
      %p123 = por %p121, %p122
      %s124 = ssub.s32 %s20, %s32
      %s125 = ssub.s32 %s21, %s28
      %s126 = sor.u32 %s124, %s125
      %p127 = scmp.eq.s32.totalorder %s126, 0
      %s129 = sadd.s32 %s128, 1
      %s130 = scalar_select %p127, %s128, %s129
      %p133 = pneg %p127
      %p134 = scmp.eq.s32.totalorder %s13, 1
      %p135 = por %p133, %p134
      %p136 = scmp.ne.s32.totalorder %s128, %s131
      %p137 = scmp.eq.s32.totalorder %s13, 0
      %p138 = por %p136, %p137
      %p139 = scmp.ne.s32.totalorder %s128, %s131
      %p140 = scmp.eq.s32.totalorder %s18, 1
      %p141 = por %p139, %p140
      %p142 = scmp.ne.s32.totalorder %s131, %s132
      %p143 = scmp.eq.s32.totalorder %s18, 0
      %p144 = por %p142, %p143
      %p145 = scmp.ne.s32.totalorder %s131, %s132
      %p146 = scmp.eq.s32.totalorder %s19, 1
      %p147 = por %p145, %p146
      %p149 = scmp.ne.s32.totalorder %s132, %s148
      %p150 = scmp.eq.s32.totalorder %s19, 0
      %p151 = por %p149, %p150
      %p152 = scmp.le.s32.totalorder 1, %s13
      %p153 = scmp.lt.s32.totalorder %s13, 3
      %p154 = pnand %p152, %p153
      %p155 = pneg %p154
      // Predicated region
      $region9: #{tpu_custom_call.1} parent=5 // pred_check
        _
      $region10: #{tpu_custom_call.1} parent=5 // pred_check_branch
        %157 = sbr.rel (%p154) target = $region12
      $region11: #{tpu_custom_call.1} parent=5 // pred_region
        %s158 = ssub.s32 %s13, 1
        // Predicated region
        $region13: #{tpu_custom_call.1} parent=11 // pred_check
          %p159 = pneg %p74
        $region14: #{tpu_custom_call.1} parent=11 // pred_check_branch
          %161 = sbr.rel (%p159) target = $region16
        $region15: #{tpu_custom_call.1} parent=11 // pred_region
          _
        $region16: #{tpu_custom_call.1} parent=11 // pred_fallthru
          _
        // Predicated region
        $region17: #{tpu_custom_call.1} parent=11 // pred_check
          %p162 = pneg %p95
        $region18: #{tpu_custom_call.1} parent=11 // pred_check_branch
          %164 = sbr.rel (%p162) target = $region20
        $region19: #{tpu_custom_call.1} parent=11 // pred_region
          _
        $region20: #{tpu_custom_call.1} parent=11 // pred_fallthru
          _
        // Predicated region
        $region21: #{tpu_custom_call.1} parent=11 // pred_check
          %p165 = pneg %p116
        $region22: #{tpu_custom_call.1} parent=11 // pred_check_branch
          %167 = sbr.rel (%p165) target = $region24
        $region23: #{tpu_custom_call.1} parent=11 // pred_region
          _
        $region24: #{tpu_custom_call.1} parent=11 // pred_fallthru
          _
      $region12: #{tpu_custom_call.1} parent=5 // pred_fallthru
        _
      %p168 = scmp.lt.s32.totalorder %s13, 2
      // Predicated region
      $region25: #{tpu_custom_call.1} parent=5 // pred_check
        %p169 = pneg %p168
      $region26: #{tpu_custom_call.1} parent=5 // pred_check_branch
        %171 = sbr.rel (%p169) target = $region28
      $region27: #{tpu_custom_call.1} parent=5 // pred_region
        // Predicated region
        $region29: #{tpu_custom_call.1} parent=27 // pred_check
          %p172 = pneg %p47
        $region30: #{tpu_custom_call.1} parent=27 // pred_check_branch
          %174 = sbr.rel (%p172) target = $region32
        $region31: #{tpu_custom_call.1} parent=27 // pred_region
          %s175 = smul.u32 2, %s21
          %p176 = scmp.lt.s32.totalorder %s20, 1
          %s177 = scalar_select %p176, %s20, 1
          %p178 = scmp.lt.s32.totalorder %s175, 1
          %s179 = scalar_select %p178, %s175, 1
          %s180 = smul.addr %s177, 2
          %s181 = sadd.s32 %s179, %s180
          %s182 = smul.addr %s181, 4
          %s183 = scalar_lea.vmem %s0, %s182
          %s184 = smul.u32 2, %s21
        $region32: #{tpu_custom_call.1} parent=27 // pred_fallthru
          _
      $region28: #{tpu_custom_call.1} parent=5 // pred_fallthru
        _
      %p185 = scmp.le.s32.totalorder 1, %s13
      %p186 = scmp.lt.s32.totalorder %s13, 3
      %p187 = pnand %p185, %p186
      %p188 = pneg %p187
      // Predicated region
      $region33: #{tpu_custom_call.1} parent=5 // pred_check
        _
      $region34: #{tpu_custom_call.1} parent=5 // pred_check_branch
        %190 = sbr.rel (%p187) target = $region36
      $region35: #{tpu_custom_call.1} parent=5 // pred_region
        %s191 = ssub.s32 %s13, 1
        %s192 = smul.u32 2, %s23
        %p193 = scmp.lt.s32.totalorder %s22, 1
        %s194 = scalar_select %p193, %s22, 1
        %p195 = scmp.lt.s32.totalorder %s192, 1
        %s196 = scalar_select %p195, %s192, 1
        %s197 = smul.addr %s194, 2
        %s198 = sadd.s32 %s196, %s197
        %s199 = smul.addr %s198, 4
        %s200 = scalar_lea.vmem %s0, %s199
        %p201 = pneg %p53
        %p202 = pneg %p50
        %p203 = pneg %p74
        %p204 = pneg %p71
        %p205 = pneg %p95
        %p206 = pneg %p92
        %p207 = pneg %p116
        %p208 = pneg %p113
        %p209 = pneg %p144
        %p210 = pneg %p141
        %s211 = sand.u32 %s131, 1
        %s212 = scalar_lea.sflag [#allocation3], %s211
        %s213 = sand.u32 %s131, 1
        %s214 = smul.addr %s213, 16
        %s215 = scalar_lea.vmem [#allocation2], %s214
        %s216 = smul.u32 2, %s23
        %p217 = scmp.lt.s32.totalorder %s22, 1
        %s218 = scalar_select %p217, %s22, 1
        %p219 = scmp.lt.s32.totalorder %s216, 1
        %s220 = scalar_select %p219, %s216, 1
        %s221 = smul.addr %s218, 2
        %s222 = sadd.s32 %s220, %s221
        %s223 = smul.addr %s222, 4
        %s224 = scalar_lea.vmem %s0, %s223
        %s225 = smul.u32 2, %s23
        %s226 = smul.u32 2, %s23
        %v227 = vld [vmem:[%s224] sm:$0xff]
        %v228 = vld [vmem:[%s1] sm:$0xff]
        %v230 = vcombine.high %v227, %v227
        %vm231 = vcmask 31744
        %v233 = vsel %vm231, %v228, 0
        %vm235 = vcmask 1043456
        %v236 = vsel %vm235, %v227, 0
        %v238 = vsel %vm235, %v230, 0
        %240 = vmatprep.subr.mxu0 %v238
        %241 = vmatpush1.msra.mxu0 %v236
        %242 = vmatprep.subr.mxu0 0.0
        %243 = vmatpush1.msra.mxu0 0.0
        %244 = vmatprep.subr.mxu0 0.0
        %245 = vmatpush1.msra.mxu0 0.0
        %246 = vmatprep.subr.mxu0 0.0
        %247 = vmatpush1.msra.mxu0 0.0
        %248 = vmatprep.subr.mxu0 0.0
        %249 = vmatpush1.msra.mxu0 0.0
        %250 = vmatprep.subr.mxu0 0.0
        %251 = vmatpush1.msra.mxu0 0.0
        %252 = vmatprep.subr.mxu0 0.0
        %253 = vmatpush1.msra.mxu0 0.0
        %254 = vmatprep.subr.mxu0 0.0
        %255 = vmatpush1.msra.mxu0 0.0
        %256 = vmatprep.subr.mxu0 0.0
        %257 = vmatpush1.msra.mxu0 0.0
        %258 = vmatprep.subr.mxu0 0.0
        %259 = vmatpush1.msra.mxu0 0.0
        %260 = vmatprep.subr.mxu0 0.0
        %261 = vmatpush1.msra.mxu0 0.0
        %262 = vmatprep.subr.mxu0 0.0
        %263 = vmatpush1.msra.mxu0 0.0
        %264 = vmatprep.subr.mxu0 0.0
        %265 = vmatpush1.msra.mxu0 0.0
        %266 = vmatprep.subr.mxu0 0.0
        %267 = vmatpush1.msra.mxu0 0.0
        %268 = vmatprep.subr.mxu0 0.0
        %269 = vmatpush1.msra.mxu0 0.0
        %270 = vmatprep.subr.mxu0 0.0
        %271 = vmatpush1.msra.mxu0 0.0
        %272 = vmatprep.subr.mxu0 0.0
        %273 = vmatpush1.msra.mxu0 0.0
        %274 = vmatprep.subr.mxu0 0.0
        %275 = vmatpush1.msra.mxu0 0.0
        %276 = vmatprep.subr.mxu0 0.0
        %277 = vmatpush1.msra.mxu0 0.0
        %278 = vmatprep.subr.mxu0 0.0
        %279 = vmatpush1.msra.mxu0 0.0
        %280 = vmatprep.subr.mxu0 0.0
        %281 = vmatpush1.msra.mxu0 0.0
        %282 = vmatprep.subr.mxu0 0.0
        %283 = vmatpush1.msra.mxu0 0.0
        %284 = vmatprep.subr.mxu0 0.0
        %285 = vmatpush1.msra.mxu0 0.0
        %286 = vmatprep.subr.mxu0 0.0
        %287 = vmatpush1.msra.mxu0 0.0
        %288 = vmatprep.subr.mxu0 0.0
        %289 = vmatpush1.msra.mxu0 0.0
        %290 = vmatprep.subr.mxu0 0.0
        %291 = vmatpush1.msra.mxu0 0.0
        %292 = vmatprep.subr.mxu0 0.0
        %293 = vmatpush1.msra.mxu0 0.0
        %294 = vmatprep.subr.mxu0 0.0
        %295 = vmatpush1.msra.mxu0 0.0
        %296 = vmatprep.subr.mxu0 0.0
        %297 = vmatpush1.msra.mxu0 0.0
        %298 = vmatprep.subr.mxu0 0.0
        %299 = vmatpush1.msra.mxu0 0.0
        %300 = vmatprep.subr.mxu0 0.0
        %301 = vmatpush1.msra.mxu0 0.0
        %302 = vmatprep.subr.mxu0 0.0
        %303 = vmatpush1.msra.mxu0 0.0
        %304 = vmatprep.mubr.f32.mxu0 0.0
        %305 = vmatmul.mubr.f32.gmra.mrb[0].mxu0 %v233
        %v306 = vpop.f32.mrb[0].mxu0
        %v307 = vadd.f32 0.0, %v306
        %v308 = vpop.f32.mrb[0].mxu0
        %v309 = vadd.f32 0.0, %v308
        %310 = vdwg.mxu0
        %v311 = vld [vmem:[%s2] sm:$0xff]
        %313 = vset.pattern.permute.xlu0 0
        %314 = vperm.xlu0 %313, %v311
        %v315 = vpop.permute.xlu0 %314
        %v317 = vmul.f32 %v307, %v315
        %v318 = vmul.f32 %v309, %v315
        %v319 = vld [vmem:[%s3] sm:$0xff]
        %321 = vset.pattern.permute.xlu0 0
        %322 = vperm.xlu0 %321, %v319
        %v323 = vpop.permute.xlu0 %322
        %v325 = vadd.f32 %v317, %v323
        %v326 = vadd.f32 %v318, %v323
        %v327 = vsub.f32 0.0, %v325
        %v328 = vsub.f32 0.0, %v326
        %v329 = vmul.f32 %v327, 1.442695
        %v330 = vpow.pop %v329
        %v331 = vmul.f32 %v328, 1.442695
        %v332 = vpow.pop %v331
        %v333 = vadd.f32 %v330, 1.0
        %v334 = vadd.f32 %v332, 1.0
        %v335 = vrcp.pop %v333
        %v336 = vmul.f32 1.0, %v335
        %v337 = vrcp.pop %v334
        %v338 = vmul.f32 1.0, %v337
        %v339 = vmul.f32 %v325, %v336
        %v340 = vmul.f32 %v326, %v338
        %341 = vst [vmem:[%s215] sm:$0xff] %v339
        %342 = vst [vmem:[%s215 + $0x8] sm:$0xff] %v340
        %s343 = sand.u32 %s131, 1
        %s344 = scalar_lea.sflag [#allocation3], %s343
        %s345 = sand.u32 %s131, 1
        %s346 = smul.addr %s345, 16
        %s347 = scalar_lea.vmem [#allocation2], %s346
        // Predicated region
        $region37: #{tpu_custom_call.1} parent=35 // pred_check
          %p348 = pneg %p141
        $region38: #{tpu_custom_call.1} parent=35 // pred_check_branch
          %350 = sbr.rel (%p348) target = $region40
        $region39: #{tpu_custom_call.1} parent=35 // pred_region
          %s351 = smul.u32 2, %s23
          %s353 = ssub.s32 256, 256
          %354 = vsyncadd %s344, %s353
          %s355 = smul.addr %s22, 2
          %s356 = sadd.s32 %s351, %s355
          %s357 = smul.addr %s356, 128
          %s358 = scalar_lea.hbm %s4, %s357
          %s360 = sshll.u32 %s347, 4
          %s361 = int_to_ptr.vmem [resolvable:$true] %s360
          %363 = dma.vmem_to_hbm [thread:$0]  %s361, 256, %s358, %s344
        $region40: #{tpu_custom_call.1} parent=35 // pred_fallthru
          _
      $region36: #{tpu_custom_call.1} parent=5 // pred_fallthru
        _
      %p364 = scmp.le.s32.totalorder 2, %s13
      // Predicated region
      $region41: #{tpu_custom_call.1} parent=5 // pred_check
        %p365 = pneg %p364
      $region42: #{tpu_custom_call.1} parent=5 // pred_check_branch
        %367 = sbr.rel (%p365) target = $region44
      $region43: #{tpu_custom_call.1} parent=5 // pred_region
        %s368 = ssub.s32 %s13, 2
        // Predicated region
        $region45: #{tpu_custom_call.1} parent=43 // pred_check
          %p369 = pneg %p147
        $region46: #{tpu_custom_call.1} parent=43 // pred_check_branch
          %371 = sbr.rel (%p369) target = $region48
        $region47: #{tpu_custom_call.1} parent=43 // pred_region
          %s372 = sand.u32 %s132, 1
          %s373 = scalar_lea.sflag [#allocation3], %s372
          %s374 = sand.u32 %s132, 1
          %s375 = smul.addr %s374, 16
          %s376 = scalar_lea.vmem [#allocation2], %s375
          %377 = dma.done %s373, 256
        $region48: #{tpu_custom_call.1} parent=43 // pred_fallthru
          _
      $region44: #{tpu_custom_call.1} parent=5 // pred_fallthru
        _
    $region6: #{tpu_custom_call.1} parent=1 // loop_footer
      %s17 = sadd.s32 1, %s13
    $region7: #{tpu_custom_call.1} parent=1 // loop_footer_branch
      %12 = sbr.rel target = $region3
    $region8: #{tpu_custom_call.1} parent=1 // loop_exit
      _
    %378 = vsyncpa [#allocation3], 1
    %s379 = scalar_lea.sflag [#allocation3], 1
    %380 = vsyncpa %s379, 1

</llo_original>
